<compile_context>
chip_gen: v5e
topology: v5e:2x2
jax: 0.10.0
libtpu: 0.0.40
codegen_flags: <defaults>
</compile_context>

<pallas_src>
from typing import NamedTuple

import jax
import jax.numpy as jnp
from jax.experimental import pallas as pl
from jax.experimental.pallas import tpu as pltpu


# ----------------------------------------------------------------------------
# Kernel
# ----------------------------------------------------------------------------
def _mlp_fused_kernel(x_ref, w_ref, b_ref, out_ref):
    """Fused MLP over one batch tile, batch on the lane axis.

    x_ref:   (F, TB)          activations, features on sublanes, batch on lanes
    w_ref:   (depth, F, F)    zero-padded weights, PyTorch (out_f, in_f) layout
    b_ref:   (depth, F, 1)    zero-padded biases, always f32
    out_ref: (F, TB)
    """
    depth = w_ref.shape[0]
    compute_dtype = x_ref.dtype          # bf16 fast path or f32

    h = x_ref[...]                       # (F, TB)
    for i in range(depth):               # statically unrolled at trace time
        # MXU matmul, f32 accumulation; y = W_i @ h  -> (F, TB)
        y = jnp.dot(w_ref[i], h, preferred_element_type=jnp.float32)
        y = y + b_ref[i]                 # (F, 1) f32 bias broadcast over lanes
        if i < depth - 1:
            h = jnp.maximum(y, 0.0).astype(compute_dtype)   # ReLU, feed MXU
        else:
            h = y
    out_ref[...] = h.astype(out_ref.dtype)


# ----------------------------------------------------------------------------
# Parameter packing (done once, outside the hot path)
# ----------------------------------------------------------------------------
class PackedMLPParams(NamedTuple):
    w: jax.Array            # (depth, F, F)  zero-padded, (out_f, in_f) layout
    b: jax.Array            # (depth, F, 1)  f32, zero-padded
    in_features: int
    out_features: int


def _round_up(x, m):
    return ((x + m - 1) // m) * m


def pack_mlp_params(params, *, weight_dtype=None):
    """Pack per-layer (W, b) (PyTorch layouts: W (out_f, in_f), b (out_f,))
    into two stacked, zero-padded arrays.

    All layers share one padded feature width F (multiple of 16 so both f32
    and bf16 sublane tilings are satisfied).  Zero padding is exact: padded
    rows stay identically zero through every Linear+ReLU.
    NOTE: for wildly varying layer widths a per-layer split would avoid the
    O(F^2) padding waste; for this module's near-uniform small widths it is
    the cheapest layout.
    """
    depth = len(params)
    in_f = params[0][0].shape[1]
    out_f = params[-1][0].shape[0]
    feats = [in_f] + [w.shape[0] for w, _ in params]
    F = _round_up(max(feats), 16)

    wdt = weight_dtype if weight_dtype is not None else params[0][0].dtype
    w_packed = jnp.zeros((depth, F, F), wdt)
    b_packed = jnp.zeros((depth, F, 1), jnp.float32)   # biases always f32
    for i, (w, b) in enumerate(params):
        of, inf_ = w.shape
        w_packed = w_packed.at[i, :of, :inf_].set(w.astype(wdt))
        b_packed = b_packed.at[i, :of, 0].set(b.reshape(-1).astype(jnp.float32))
    return PackedMLPParams(w=w_packed, b=b_packed,
                           in_features=in_f, out_features=out_f)


# ----------------------------------------------------------------------------
# Wrapper
# ----------------------------------------------------------------------------
def _num_tensorcores():
    """2 on v7x-class chips (megacore), else 1."""
    try:
        kind = jax.devices()[0].device_kind.lower()
        return 2 if ("v7" in kind or "7x" in kind) else 1
    except Exception:
        return 1


def _pick_batch_tile(batch, block_batch):
    """Batch is the lane axis: tile must be a multiple of 128 or the full batch."""
    if block_batch is None:
        tiles = _num_tensorcores() if batch >= 256 else 1   # >=2 tiles on v7x
        tb = -(-batch // tiles)
        tb = min(tb, 2048)       # keep pipelining for huge batches
    else:
        tb = block_batch
    tb = max(1, min(tb, batch))
    if tb < batch:
        tb = _round_up(tb, 128)
        if tb >= batch:
            tb = batch
    return tb


def mlp_forward(x, packed: PackedMLPParams, *, block_batch=None):
    """Fused MLP forward.

    x:      (batch, in_f)  standard layout; transposed to batch-on-lanes here.
    packed: PackedMLPParams from pack_mlp_params.
    Returns (batch, out_f) in x.dtype.
    """
    batch, in_f = x.shape
    assert in_f == packed.in_features, (in_f, packed.in_features)
    depth, F, _ = packed.w.shape
    out_f = packed.out_features

    tb = _pick_batch_tile(batch, block_batch)
    grid = (pl.cdiv(batch, tb),)

    # Layout plumbing (wrapper-side, fused by XLA): (batch, in_f) -> (F, batch).
    xt = jnp.pad(x.T, ((0, F - in_f), (0, 0)))

    act_bytes = x.dtype.itemsize
    tile_bytes = F * tb * max(act_bytes, 4)
    resident_bytes = (packed.w.size * packed.w.dtype.itemsize
                      + packed.b.size * packed.b.dtype.itemsize)
    # Double-buffered x/out tiles + resident (double-buffered) params + slack.
    vmem_limit = int(min(64 << 20,
                         max(16 << 20, 6 * tile_bytes + 4 * resident_bytes)))

    flops = 2 * batch * F * F * depth                      # advisory (padded dims)
    bytes_accessed = (xt.size * act_bytes + resident_bytes
                      + F * batch * act_bytes)

    out_t = pl.pallas_call(
        _mlp_fused_kernel,
        out_shape=jax.ShapeDtypeStruct((F, batch), x.dtype),
        grid=grid,
        in_specs=[
            # activations: tiled along the batch (lane) axis
            pl.BlockSpec((F, tb), lambda i: (0, i)),
            # packed weights / biases: VMEM-resident across all grid steps
            pl.BlockSpec((depth, F, F), lambda i: (0, 0, 0)),
            pl.BlockSpec((depth, F, 1), lambda i: (0, 0, 0)),
        ],
        out_specs=pl.BlockSpec((F, tb), lambda i: (0, i)),
        compiler_params=pltpu.CompilerParams(
            dimension_semantics=("parallel",),      # batch tiles -> v7x megacore
            vmem_limit_bytes=vmem_limit,
        ),
        cost_estimate=pl.CostEstimate(
            flops=flops, transcendentals=0, bytes_accessed=bytes_accessed),
    )(xt, packed.w, packed.b)

    # Unpad + transpose back to the module's (batch, out_f) layout.
    return out_t[:out_f, :].T


# ----------------------------------------------------------------------------
# Init / reference (PyTorch nn.Linear layouts and defaults)
# ----------------------------------------------------------------------------
def init_mlp_params(key, units_list, dtype=jnp.float32):
    """nn.Linear-style init: W (out_f, in_f), b (out_f,), U(-1/sqrt(in_f), +)."""
    params = []
    for i in range(len(units_list) - 1):
        in_f, out_f = units_list[i], units_list[i + 1]
        key, kw, kb = jax.random.split(key, 3)
        bound = 1.0 / (in_f ** 0.5)
        w = jax.random.uniform(kw, (out_f, in_f), dtype, -bound, bound)
        b = jax.random.uniform(kb, (out_f,), jnp.float32, -bound, bound)
        params.append((w, b))
    return params


def mlp_reference(x, params):
    """Plain-JAX f32 reference matching the PyTorch forward."""
    depth = len(params)
    for i, (w, b) in enumerate(params):
        x = x @ w.T + b
        if i < depth - 1:
            x = jnp.maximum(x, 0.0)
    return x


# ----------------------------------------------------------------------------
# Demo / correctness checks
# ----------------------------------------------------------------------------
if __name__ == "__main__":
    key = jax.random.PRNGKey(0)
    units_list = [16, 32, 32, 8]          # MLP(units_list, act_fn=ReLU), depth=3

    kp, kx1, kx2, kx3 = jax.random.split(key, 4)
    params = init_mlp_params(kp, units_list, dtype=jnp.float32)
    packed_f32 = pack_mlp_params(params)

    # 1) Small batch -> single full-batch tile, strict f32 tolerance.
    x1 = jax.random.normal(kx1, (8, units_list[0]), jnp.float32)
    o1 = jax.block_until_ready(mlp_forward(x1, packed_f32))
    r1 = mlp_reference(x1, params)
    assert o1.shape == (8, units_list[-1])
    assert jnp.allclose(o1, r1, atol=1e-5, rtol=1e-5), \
        float(jnp.max(jnp.abs(o1 - r1)))

    # 2) Batch-tiled grid with a ragged tail: batch=300, tb=128 -> grid (3,).
    x2 = jax.random.normal(kx2, (300, units_list[0]), jnp.float32)
    o2 = jax.block_until_ready(mlp_forward(x2, packed_f32, block_batch=128))
    r2 = mlp_reference(x2, params)
    assert o2.shape == (300, units_list[-1])
    assert jnp.allclose(o2, r2, atol=1e-5, rtol=1e-5), \
        float(jnp.max(jnp.abs(o2 - r2)))

    # 3) bf16 MXU operands (v5e/v6e/v7x fast path), f32 accumulate + epilogue;
    #    default tiling (>= 2 parallel tiles on v7x for batch >= 256).
    x3 = jax.random.normal(kx3, (512, units_list[0]), jnp.float32)
    packed_bf16 = pack_mlp_params(params, weight_dtype=jnp.bfloat16)
    o3 = jax.block_until_ready(mlp_forward(x3.astype(jnp.bfloat16), packed_bf16))
    r3 = mlp_reference(x3, params)
    assert jnp.allclose(o3.astype(jnp.float32), r3, atol=1e-1, rtol=5e-2)

    print("KERNEL_OK")
</pallas_src>

<mosaic_0001>
module attributes {stable_mosaic.version = 11 : i64} {
  func.func @_mlp_fused_kernel(%arg0: i32, %arg1: memref<32x8xf32, #tpu.memory_space<vmem>>, %arg2: memref<3x32x32xf32, #tpu.memory_space<vmem>>, %arg3: memref<3x32x1xf32, #tpu.memory_space<vmem>>, %arg4: memref<32x8xf32, #tpu.memory_space<vmem>>) attributes {dimension_semantics = [#tpu.dimension_semantics<parallel>], iteration_bounds = array<i64: 1>, scalar_prefetch = 0 : i64, scratch_operands = 0 : i64, tpu.core_type = #tpu.core_type<tc>, window_params = [{transform_indices = @transform_0, window_bounds = array<i64: 32, 8>}, {pipeline_mode = #tpu.pipeline_mode<synchronous>, transform_indices = @transform_1, window_bounds = array<i64: 3, 32, 32>}, {pipeline_mode = #tpu.pipeline_mode<synchronous>, transform_indices = @transform_2, window_bounds = array<i64: 3, 32, 1>}, {transform_indices = @transform_3, window_bounds = array<i64: 32, 8>}]} {
    %c0 = arith.constant 0 : index
    %c0_0 = arith.constant 0 : index
    %0 = vector.load %arg1[%c0, %c0_0] : memref<32x8xf32, #tpu.memory_space<vmem>>, vector<32x8xf32>
    %c0_1 = arith.constant 0 : index
    %c0_2 = arith.constant 0 : index
    %c0_3 = arith.constant 0 : index
    %1 = vector.load %arg2[%c0_1, %c0_2, %c0_3] : memref<3x32x32xf32, #tpu.memory_space<vmem>>, vector<1x32x32xf32>
    %2 = vector.shape_cast %1 : vector<1x32x32xf32> to vector<32x32xf32>
    %cst = arith.constant dense<0.000000e+00> : vector<32x8xf32>
    %3 = tpu.matmul %2, %0, %cst {dimension_numbers = #tpu.dot_dimension_numbers<[1], [0], [0], [1], [0, 0, 1, 1], [], []>} : vector<32x32xf32>, vector<32x8xf32>, vector<32x8xf32> -> vector<32x8xf32>
    %c0_4 = arith.constant 0 : index
    %c0_5 = arith.constant 0 : index
    %c0_6 = arith.constant 0 : index
    %4 = vector.load %arg3[%c0_4, %c0_5, %c0_6] : memref<3x32x1xf32, #tpu.memory_space<vmem>>, vector<1x32x1xf32>
    %5 = vector.shape_cast %4 : vector<1x32x1xf32> to vector<32x1xf32>
    %6 = vector.broadcast %5 : vector<32x1xf32> to vector<32x8xf32>
    %7 = arith.addf %3, %6 : vector<32x8xf32>
    %cst_7 = arith.constant 0.000000e+00 : f32
    %8 = vector.broadcast %cst_7 : f32 to vector<32x8xf32>
    %9 = arith.maximumf %7, %8 : vector<32x8xf32>
    %c1 = arith.constant 1 : index
    %c0_8 = arith.constant 0 : index
    %c0_9 = arith.constant 0 : index
    %10 = vector.load %arg2[%c1, %c0_8, %c0_9] : memref<3x32x32xf32, #tpu.memory_space<vmem>>, vector<1x32x32xf32>
    %11 = vector.shape_cast %10 : vector<1x32x32xf32> to vector<32x32xf32>
    %cst_10 = arith.constant dense<0.000000e+00> : vector<32x8xf32>
    %12 = tpu.matmul %11, %9, %cst_10 {dimension_numbers = #tpu.dot_dimension_numbers<[1], [0], [0], [1], [0, 0, 1, 1], [], []>} : vector<32x32xf32>, vector<32x8xf32>, vector<32x8xf32> -> vector<32x8xf32>
    %c1_11 = arith.constant 1 : index
    %c0_12 = arith.constant 0 : index
    %c0_13 = arith.constant 0 : index
    %13 = vector.load %arg3[%c1_11, %c0_12, %c0_13] : memref<3x32x1xf32, #tpu.memory_space<vmem>>, vector<1x32x1xf32>
    %14 = vector.shape_cast %13 : vector<1x32x1xf32> to vector<32x1xf32>
    %15 = vector.broadcast %14 : vector<32x1xf32> to vector<32x8xf32>
    %16 = arith.addf %12, %15 : vector<32x8xf32>
    %cst_14 = arith.constant 0.000000e+00 : f32
    %17 = vector.broadcast %cst_14 : f32 to vector<32x8xf32>
    %18 = arith.maximumf %16, %17 : vector<32x8xf32>
    %c2 = arith.constant 2 : index
    %c0_15 = arith.constant 0 : index
    %c0_16 = arith.constant 0 : index
    %19 = vector.load %arg2[%c2, %c0_15, %c0_16] : memref<3x32x32xf32, #tpu.memory_space<vmem>>, vector<1x32x32xf32>
    %20 = vector.shape_cast %19 : vector<1x32x32xf32> to vector<32x32xf32>
    %cst_17 = arith.constant dense<0.000000e+00> : vector<32x8xf32>
    %21 = tpu.matmul %20, %18, %cst_17 {dimension_numbers = #tpu.dot_dimension_numbers<[1], [0], [0], [1], [0, 0, 1, 1], [], []>} : vector<32x32xf32>, vector<32x8xf32>, vector<32x8xf32> -> vector<32x8xf32>
    %c2_18 = arith.constant 2 : index
    %c0_19 = arith.constant 0 : index
    %c0_20 = arith.constant 0 : index
    %22 = vector.load %arg3[%c2_18, %c0_19, %c0_20] : memref<3x32x1xf32, #tpu.memory_space<vmem>>, vector<1x32x1xf32>
    %23 = vector.shape_cast %22 : vector<1x32x1xf32> to vector<32x1xf32>
    %24 = vector.broadcast %23 : vector<32x1xf32> to vector<32x8xf32>
    %25 = arith.addf %21, %24 : vector<32x8xf32>
    %c0_21 = arith.constant 0 : index
    %c0_22 = arith.constant 0 : index
    %26 = vector.load %arg4[%c0_21, %c0_22] : memref<32x8xf32, #tpu.memory_space<vmem>>, vector<32x8xf32>
    tpu.vector_store %arg4[%c0_21, %c0_22], %25 {strides = array<i32>} : memref<32x8xf32, #tpu.memory_space<vmem>>, vector<32x8xf32>,
    return
  }
  func.func @transform_0(%arg0: i32) -> (i32, i32) {
    %c0_i32 = arith.constant 0 : i32
    %c0_i32_0 = arith.constant 0 : i32
    return %c0_i32, %arg0 : i32, i32
  }
  func.func @transform_1(%arg0: i32) -> (i32, i32, i32) {
    %c0_i32 = arith.constant 0 : i32
    %c0_i32_0 = arith.constant 0 : i32
    %c0_i32_1 = arith.constant 0 : i32
    %c0_i32_2 = arith.constant 0 : i32
    return %c0_i32, %c0_i32_0, %c0_i32_1 : i32, i32, i32
  }
  func.func @transform_2(%arg0: i32) -> (i32, i32, i32) {
    %c0_i32 = arith.constant 0 : i32
    %c0_i32_0 = arith.constant 0 : i32
    %c0_i32_1 = arith.constant 0 : i32
    %c0_i32_2 = arith.constant 0 : i32
    return %c0_i32, %c0_i32_0, %c0_i32_1 : i32, i32, i32
  }
  func.func @transform_3(%arg0: i32) -> (i32, i32) {
    %c0_i32 = arith.constant 0 : i32
    %c0_i32_0 = arith.constant 0 : i32
    return %c0_i32, %arg0 : i32, i32
  }
}

</mosaic_0001>

<llo_original>
// kernel: tpu_custom_call.1
$region0: #{tpu_custom_call.1}
  #allocation0 [shape = 'u32[]', space=smem, size = 0x4, offset = 0x4, fixed_abs, tag = 'smem constant byte address 0x4 - core index']
  #allocation1 [shape = 'u32[72,128]{1,0:T(1,128)}', space=vmem, size = 0x9000, scoped, tag = 'internal scratch']
  %s0 = inlined_call_operand.vmem [shape: f32[32,8], index: 0, kind: input, shape index: {}]
  %s1 = inlined_call_operand.vmem [shape: f32[3,32,32], index: 1, kind: input, shape index: {}]
  %s2 = inlined_call_operand.vmem [shape: f32[3,32,1], index: 2, kind: input, shape index: {}]
  %s3 = inlined_call_operand.vmem [shape: f32[32,8], index: 3, kind: output, shape index: {}]
  %s4 = sld [smem:[#allocation0]]
  $region22: #{tpu_custom_call.1} parent=0
    _
  %s6 = ssub.s32 1, %s4
  %s7 = scalar_select 0, %s6, %s4
  // Predicated region
  $region2: #{tpu_custom_call.1} parent=0 // pred_check
    _
  $region3: #{tpu_custom_call.1} parent=0 // pred_check_branch
    %9 = sbr.rel (0) target = $region5
  $region4: #{tpu_custom_call.1} parent=0 // pred_region
    _
  $region5: #{tpu_custom_call.1} parent=0 // pred_fallthru
    _
  // Predicated region
  $region6: #{tpu_custom_call.1} parent=0 // pred_check
    _
  $region7: #{tpu_custom_call.1} parent=0 // pred_check_branch
    %11 = sbr.rel (0) target = $region9
  $region8: #{tpu_custom_call.1} parent=0 // pred_region
    _
  $region9: #{tpu_custom_call.1} parent=0 // pred_fallthru
    _
  // Predicated region
  $region10: #{tpu_custom_call.1} parent=0 // pred_check
    _
  $region11: #{tpu_custom_call.1} parent=0 // pred_check_branch
    %13 = sbr.rel (0) target = $region13
  $region12: #{tpu_custom_call.1} parent=0 // pred_region
    _
  $region13: #{tpu_custom_call.1} parent=0 // pred_fallthru
    _
  %v14 = vld [vmem:[%s0] sm:$0xff]
  %v15 = vld [vmem:[%s0 + $0x8] sm:$0xff]
  %v16 = vld [vmem:[%s0 + $0x10] sm:$0xff]
  %v17 = vld [vmem:[%s0 + $0x18] sm:$0xff]
  %v18 = vld [vmem:[%s1] sm:$0xff]
  %v19 = vld [vmem:[%s1 + $0x8] sm:$0xff]
  %v20 = vld [vmem:[%s1 + $0x10] sm:$0xff]
  %v21 = vld [vmem:[%s1 + $0x18] sm:$0xff]
  %v22 = vld [vmem:[%s2] sm:$0xff]
  %v23 = vld [vmem:[%s2 + $0x8] sm:$0xff]
  %v24 = vld [vmem:[%s2 + $0x10] sm:$0xff]
  %v25 = vld [vmem:[%s2 + $0x18] sm:$0xff]
  %27 = vset.pattern.permute.xlu0 0
  %28 = vperm.xlu0 %27, %v22
  %v29 = vpop.permute.xlu0 %28
  %32 = vset.pattern.permute.xlu0 0
  %33 = vperm.xlu0 %32, %v23
  %v34 = vpop.permute.xlu0 %33
  %37 = vset.pattern.permute.xlu0 0
  %38 = vperm.xlu0 %37, %v24
  %v39 = vpop.permute.xlu0 %38
  %42 = vset.pattern.permute.xlu0 0
  %43 = vperm.xlu0 %42, %v25
  %v44 = vpop.permute.xlu0 %43
  %vm46 = vcmask 261120
  %v48 = vsel %vm46, %v18, 0
  %v51 = vsel %vm46, %v19, 0
  %v54 = vsel %vm46, %v20, 0
  %v57 = vsel %vm46, %v21, 0
  %59 = vmatpush.msra.mxu0 0.0
  %60 = vmatpush.msra.mxu0 0.0
  %61 = vmatpush.msra.mxu0 0.0
  %62 = vmatpush.msra.mxu0 0.0
  %63 = vmatpush.msra.mxu0 0.0
  %64 = vmatpush.msra.mxu0 0.0
  %65 = vmatpush.msra.mxu0 0.0
  %66 = vmatpush.msra.mxu0 0.0
  %67 = vmatpush.msra.mxu0 0.0
  %68 = vmatpush.msra.mxu0 0.0
  %69 = vmatpush.msra.mxu0 0.0
  %70 = vmatpush.msra.mxu0 0.0
  %71 = vmatpush.msra.mxu0 %v17
  %72 = vmatpush.msra.mxu0 %v16
  %73 = vmatpush.msra.mxu0 %v15
  %74 = vmatpush.msra.mxu0 %v14
  %75 = vmatmul.f32.gmra.mxu0 %v48
  %v76 = vpop.f32.mrf.mxu0
  %v77 = vadd.f32 %v29, %v76
  %78 = vmatmul.f32.gmra.mxu0 %v51
  %v79 = vpop.f32.mrf.mxu0
  %v80 = vadd.f32 %v34, %v79
  %81 = vmatmul.f32.gmra.mxu0 %v54
  %v82 = vpop.f32.mrf.mxu0
  %v83 = vadd.f32 %v39, %v82
  %84 = vmatmul.f32.gmra.mxu0 %v57
  %v85 = vpop.f32.mrf.mxu0
  %v86 = vadd.f32 %v44, %v85
  %87 = vdwg.mxu0
  %v88 = vmax.f32 %v77, 0.0
  %v89 = vmax.f32 %v80, 0.0
  %v90 = vmax.f32 %v83, 0.0
  %v91 = vmax.f32 %v86, 0.0
  %s92 = scalar_lea.vmem %s1, 32
  %v93 = vld [vmem:[%s92] sm:$0xff]
  %v94 = vld [vmem:[%s92 + $0x8] sm:$0xff]
  %v95 = vld [vmem:[%s92 + $0x10] sm:$0xff]
  %v96 = vld [vmem:[%s92 + $0x18] sm:$0xff]
  %s97 = scalar_lea.vmem %s2, 32
  %v98 = vld [vmem:[%s97] sm:$0xff]
  %v99 = vld [vmem:[%s97 + $0x8] sm:$0xff]
  %v100 = vld [vmem:[%s97 + $0x10] sm:$0xff]
  %v101 = vld [vmem:[%s97 + $0x18] sm:$0xff]
  %103 = vset.pattern.permute.xlu0 0
  %104 = vperm.xlu0 %103, %v98
  %v105 = vpop.permute.xlu0 %104
  %108 = vset.pattern.permute.xlu0 0
  %109 = vperm.xlu0 %108, %v99
  %v110 = vpop.permute.xlu0 %109
  %113 = vset.pattern.permute.xlu0 0
  %114 = vperm.xlu0 %113, %v100
  %v115 = vpop.permute.xlu0 %114
  %118 = vset.pattern.permute.xlu0 0
  %119 = vperm.xlu0 %118, %v101
  %v120 = vpop.permute.xlu0 %119
  %v123 = vsel %vm46, %v93, 0
  %v126 = vsel %vm46, %v94, 0
  %v129 = vsel %vm46, %v95, 0
  %v132 = vsel %vm46, %v96, 0
  %134 = vmatpush.msra.mxu0 0.0
  %135 = vmatpush.msra.mxu0 0.0
  %136 = vmatpush.msra.mxu0 0.0
  %137 = vmatpush.msra.mxu0 0.0
  %138 = vmatpush.msra.mxu0 0.0
  %139 = vmatpush.msra.mxu0 0.0
  %140 = vmatpush.msra.mxu0 0.0
  %141 = vmatpush.msra.mxu0 0.0
  %142 = vmatpush.msra.mxu0 0.0
  %143 = vmatpush.msra.mxu0 0.0
  %144 = vmatpush.msra.mxu0 0.0
  %145 = vmatpush.msra.mxu0 0.0
  %146 = vmatpush.msra.mxu0 %v91
  %147 = vmatpush.msra.mxu0 %v90
  %148 = vmatpush.msra.mxu0 %v89
  %149 = vmatpush.msra.mxu0 %v88
  %150 = vmatmul.f32.gmra.mxu0 %v123
  %v151 = vpop.f32.mrf.mxu0
  %v152 = vadd.f32 %v105, %v151
  %153 = vmatmul.f32.gmra.mxu0 %v126
  %v154 = vpop.f32.mrf.mxu0
  %v155 = vadd.f32 %v110, %v154
  %156 = vmatmul.f32.gmra.mxu0 %v129
  %v157 = vpop.f32.mrf.mxu0
  %v158 = vadd.f32 %v115, %v157
  %159 = vmatmul.f32.gmra.mxu0 %v132
  %v160 = vpop.f32.mrf.mxu0
  %v161 = vadd.f32 %v120, %v160
  %162 = vdwg.mxu0
  %v163 = vmax.f32 %v152, 0.0
  %v164 = vmax.f32 %v155, 0.0
  %v165 = vmax.f32 %v158, 0.0
  %v166 = vmax.f32 %v161, 0.0
  %s167 = scalar_lea.vmem %s1, 64
  %v168 = vld [vmem:[%s167] sm:$0xff]
  %v169 = vld [vmem:[%s167 + $0x8] sm:$0xff]
  %v170 = vld [vmem:[%s167 + $0x10] sm:$0xff]
  %v171 = vld [vmem:[%s167 + $0x18] sm:$0xff]
  %s172 = scalar_lea.vmem %s2, 64
  %v173 = vld [vmem:[%s172] sm:$0xff]
  %v174 = vld [vmem:[%s172 + $0x8] sm:$0xff]
  %v175 = vld [vmem:[%s172 + $0x10] sm:$0xff]
  %v176 = vld [vmem:[%s172 + $0x18] sm:$0xff]
  %178 = vset.pattern.permute.xlu0 0
  %179 = vperm.xlu0 %178, %v173
  %v180 = vpop.permute.xlu0 %179
  %183 = vset.pattern.permute.xlu0 0
  %184 = vperm.xlu0 %183, %v174
  %v185 = vpop.permute.xlu0 %184
  %188 = vset.pattern.permute.xlu0 0
  %189 = vperm.xlu0 %188, %v175
  %v190 = vpop.permute.xlu0 %189
  %193 = vset.pattern.permute.xlu0 0
  %194 = vperm.xlu0 %193, %v176
  %v195 = vpop.permute.xlu0 %194
  %v198 = vsel %vm46, %v168, 0
  %v201 = vsel %vm46, %v169, 0
  %v204 = vsel %vm46, %v170, 0
  %v207 = vsel %vm46, %v171, 0
  %209 = vmatpush.msra.mxu0 0.0
  %210 = vmatpush.msra.mxu0 0.0
  %211 = vmatpush.msra.mxu0 0.0
  %212 = vmatpush.msra.mxu0 0.0
  %213 = vmatpush.msra.mxu0 0.0
  %214 = vmatpush.msra.mxu0 0.0
  %215 = vmatpush.msra.mxu0 0.0
  %216 = vmatpush.msra.mxu0 0.0
  %217 = vmatpush.msra.mxu0 0.0
  %218 = vmatpush.msra.mxu0 0.0
  %219 = vmatpush.msra.mxu0 0.0
  %220 = vmatpush.msra.mxu0 0.0
  %221 = vmatpush.msra.mxu0 %v166
  %222 = vmatpush.msra.mxu0 %v165
  %223 = vmatpush.msra.mxu0 %v164
  %224 = vmatpush.msra.mxu0 %v163
  %225 = vmatmul.f32.gmra.mxu0 %v198
  %v226 = vpop.f32.mrf.mxu0
  %v227 = vadd.f32 %v180, %v226
  %228 = vmatmul.f32.gmra.mxu0 %v201
  %v229 = vpop.f32.mrf.mxu0
  %v230 = vadd.f32 %v185, %v229
  %231 = vmatmul.f32.gmra.mxu0 %v204
  %v232 = vpop.f32.mrf.mxu0
  %v233 = vadd.f32 %v190, %v232
  %234 = vmatmul.f32.gmra.mxu0 %v207
  %v235 = vpop.f32.mrf.mxu0
  %v236 = vadd.f32 %v195, %v235
  %237 = vdwg.mxu0
  %vm238 = vcmask 64512
  %239 = vst.msk [vmem:[%s3] sm:$0xff] %vm238, %v227
  %240 = vst.msk [vmem:[%s3 + $0x8] sm:$0xff] %vm238, %v230
  %241 = vst.msk [vmem:[%s3 + $0x10] sm:$0xff] %vm238, %v233
  %242 = vst.msk [vmem:[%s3 + $0x18] sm:$0xff] %vm238, %v236
  // Predicated region
  $region14: #{tpu_custom_call.1} parent=0 // pred_check
    _
  $region15: #{tpu_custom_call.1} parent=0 // pred_check_branch
    %244 = sbr.rel (0) target = $region17
  $region16: #{tpu_custom_call.1} parent=0 // pred_region
    _
  $region17: #{tpu_custom_call.1} parent=0 // pred_fallthru
    _
  // Predicated region
  $region18: #{tpu_custom_call.1} parent=0 // pred_check
    _
  $region19: #{tpu_custom_call.1} parent=0 // pred_check_branch
    %246 = sbr.rel (0) target = $region21
  $region20: #{tpu_custom_call.1} parent=0 // pred_region
    _
  $region21: #{tpu_custom_call.1} parent=0 // pred_fallthru
    _

</llo_original>
